<compile_context>
chip_gen: v7x
topology: tpu7x:2x2x1
jax: 0.10.0
libtpu: 0.0.40
codegen_flags: <defaults>
</compile_context>

<pallas_src>
import math

import jax
import jax.numpy as jnp
from jax import lax
from jax.experimental import pallas as pl
from jax.experimental.pallas import tpu as pltpu

INPUT_SIZE = 2
HIDDEN_SIZE = 16
OUT_SIZE = 1


def _rnn_kernel(x_ref, h0_ref, wih_ref, whh_ref, b_ref, wlin_ref, blin_ref,
                out_ref, hout_ref, hist_ref):
    """Single-invocation kernel (no grid).

    x_ref    : (T, B, INPUT_SIZE)        time-major inputs
    h0_ref   : (B, HIDDEN_SIZE)          initial hidden state
    wih_ref  : (INPUT_SIZE, HIDDEN_SIZE) W_ih^T
    whh_ref  : (HIDDEN_SIZE, HIDDEN_SIZE) W_hh^T
    b_ref    : (1, HIDDEN_SIZE)          b_ih + b_hh
    wlin_ref : (1, HIDDEN_SIZE)          W_lin (row)
    blin_ref : (1, 1)                    b_lin
    out_ref  : (T, B)                    sigmoid(linear(relu(h_t)))
    hout_ref : (B, HIDDEN_SIZE)          final hidden state
    hist_ref : (T, B, HIDDEN_SIZE)       VMEM scratch: xw, then hidden history
    """
    T, B, _ = x_ref.shape
    H = HIDDEN_SIZE

    x = x_ref[...]                                    # (T, B, I)
    wih = wih_ref[...]                                # (I, H)
    whh = whh_ref[...]                                # (H, H)

    # --- Input projection hoisted out of the recurrence (no serial dep). ---
    # xw[t] = x[t] @ W_ih^T + (b_ih + b_hh); with I == 2 this is two VPU FMAs.
    xw = b_ref[...].reshape(1, 1, H)
    for i in range(INPUT_SIZE):                       # static, tiny unroll
        xw = xw + x[:, :, i:i + 1] * wih[i:i + 1, :].reshape(1, 1, H)
    hist_ref[...] = xw                                # (T, B, H)

    # --- Serial recurrence: only h @ W_hh^T stays on the critical path. ---
    def step(t, h):
        h_new = jnp.tanh(
            hist_ref[t]
            + jnp.dot(h, whh, preferred_element_type=jnp.float32))
        hist_ref[t] = h_new                           # overwrite xw[t] with h_t
        return h_new

    h_last = lax.fori_loop(0, T, step, h0_ref[...], unroll=True)
    hout_ref[...] = h_last                            # written once, epilogue

    # --- Batched head over all T*B rows: relu -> (.,H)x(H,) -> sigmoid. ---
    y = jnp.maximum(hist_ref[...], 0.0)               # (T, B, H)
    wl = wlin_ref[...].reshape(1, 1, H)
    o = jnp.sum(y * wl, axis=-1) + blin_ref[...]      # (T, B)
    out_ref[...] = jax.nn.sigmoid(o)


def rnn_net_forward(x, hidden_prev, params):
    """x: (B, T, INPUT_SIZE), hidden_prev: (1, B, HIDDEN_SIZE).

    Returns (out (B, T, 1), hidden (1, B, HIDDEN_SIZE)) matching Net.forward.
    """
    B, T, _ = x.shape
    x_tm = jnp.transpose(x, (1, 0, 2)).astype(jnp.float32)        # (T, B, I)
    h0 = hidden_prev[0].astype(jnp.float32)                       # (B, H)

    wih_t = params["w_ih"].T.astype(jnp.float32)                  # (I, H)
    whh_t = params["w_hh"].T.astype(jnp.float32)                  # (H, H)
    b_rnn = (params["b_ih"] + params["b_hh"]).reshape(1, HIDDEN_SIZE)
    wlin = params["w_lin"].reshape(1, HIDDEN_SIZE).astype(jnp.float32)
    blin = params["b_lin"].reshape(1, 1).astype(jnp.float32)

    vmem = pl.BlockSpec(memory_space=pltpu.MemorySpace.VMEM)

    out_tb, h_final = pl.pallas_call(
        _rnn_kernel,
        out_shape=(
            jax.ShapeDtypeStruct((T, B), jnp.float32),            # lane-denser than (...,1)
            jax.ShapeDtypeStruct((B, HIDDEN_SIZE), jnp.float32),
        ),
        in_specs=[vmem] * 7,                                      # whole arrays, no per-step pipelining
        out_specs=(vmem, vmem),
        scratch_shapes=[pltpu.VMEM((T, B, HIDDEN_SIZE), jnp.float32)],
    )(x_tm, h0, wih_t, whh_t, b_rnn, wlin, blin)

    out = jnp.transpose(out_tb, (1, 0))[:, :, None]               # (B, T, 1)
    hidden = h_final[None, :, :]                                  # (1, B, H)
    return out, hidden


def init_params(key):
    """Deterministic init mirroring PyTorch's U(-1/sqrt(H), 1/sqrt(H))."""
    k = 1.0 / math.sqrt(HIDDEN_SIZE)
    keys = jax.random.split(key, 6)
    u = lambda kk, shape: jax.random.uniform(kk, shape, jnp.float32, -k, k)
    return {
        "w_ih": u(keys[0], (HIDDEN_SIZE, INPUT_SIZE)),
        "w_hh": u(keys[1], (HIDDEN_SIZE, HIDDEN_SIZE)),
        "b_ih": u(keys[2], (HIDDEN_SIZE,)),
        "b_hh": u(keys[3], (HIDDEN_SIZE,)),
        "w_lin": u(keys[4], (OUT_SIZE, HIDDEN_SIZE)),
        "b_lin": u(keys[5], (OUT_SIZE,)),
    }


def _reference(x, hidden_prev, params):
    """Pure-JAX reference of Net.forward for a correctness check."""
    h = hidden_prev[0]
    outs = []
    for t in range(x.shape[1]):
        h = jnp.tanh(x[:, t, :] @ params["w_ih"].T + params["b_ih"]
                     + h @ params["w_hh"].T + params["b_hh"])
        y = jnp.maximum(h, 0.0)
        outs.append(jax.nn.sigmoid(y @ params["w_lin"].T + params["b_lin"]))
    return jnp.stack(outs, axis=1), h[None]


if __name__ == "__main__":
    key = jax.random.PRNGKey(0)
    k_p, k_x, k_h = jax.random.split(key, 3)

    B, T = 2, 8
    params = init_params(k_p)
    x = jax.random.normal(k_x, (B, T, INPUT_SIZE), jnp.float32)
    hidden_prev = jax.random.normal(k_h, (1, B, HIDDEN_SIZE), jnp.float32)

    out, hidden = jax.jit(rnn_net_forward)(x, hidden_prev, params)
    out = jax.block_until_ready(out)
    hidden = jax.block_until_ready(hidden)

    out_ref, hidden_ref = _reference(x, hidden_prev, params)
    assert out.shape == (B, T, 1) and hidden.shape == (1, B, HIDDEN_SIZE)
    assert jnp.allclose(out, out_ref, atol=1e-5), "output mismatch"
    assert jnp.allclose(hidden, hidden_ref, atol=1e-5), "hidden mismatch"

    print("KERNEL_OK")
</pallas_src>

<mosaic_0001>
module attributes {stable_mosaic.version = 11 : i64} {
  func.func @_rnn_kernel(%arg0: memref<8x2x2xf32, #tpu.memory_space<vmem>>, %arg1: memref<2x16xf32, #tpu.memory_space<vmem>>, %arg2: memref<2x16xf32, #tpu.memory_space<vmem>>, %arg3: memref<16x16xf32, #tpu.memory_space<vmem>>, %arg4: memref<1x16xf32, #tpu.memory_space<vmem>>, %arg5: memref<1x16xf32, #tpu.memory_space<vmem>>, %arg6: memref<1x1xf32, #tpu.memory_space<vmem>>, %arg7: memref<8x2xf32, #tpu.memory_space<vmem>>, %arg8: memref<2x16xf32, #tpu.memory_space<vmem>>, %arg9: memref<8x2x16xf32, #tpu.memory_space<vmem>>) attributes {dimension_semantics = [], scalar_prefetch = 0 : i64, scratch_operands = 1 : i64, tpu.core_type = #tpu.core_type<tc>} {
    %c0 = arith.constant 0 : index
    %c0_0 = arith.constant 0 : index
    %c0_1 = arith.constant 0 : index
    %0 = vector.load %arg0[%c0, %c0_0, %c0_1] : memref<8x2x2xf32, #tpu.memory_space<vmem>>, vector<8x2x2xf32>
    %c0_2 = arith.constant 0 : index
    %c0_3 = arith.constant 0 : index
    %1 = vector.load %arg2[%c0_2, %c0_3] : memref<2x16xf32, #tpu.memory_space<vmem>>, vector<2x16xf32>
    %c0_4 = arith.constant 0 : index
    %c0_5 = arith.constant 0 : index
    %2 = vector.load %arg3[%c0_4, %c0_5] : memref<16x16xf32, #tpu.memory_space<vmem>>, vector<16x16xf32>
    %c0_6 = arith.constant 0 : index
    %c0_7 = arith.constant 0 : index
    %3 = vector.load %arg4[%c0_6, %c0_7] : memref<1x16xf32, #tpu.memory_space<vmem>>, vector<1x16xf32>
    %4 = vector.shape_cast %3 : vector<1x16xf32> to vector<1x1x16xf32>
    %5 = vector.extract_strided_slice %0 {offsets = [0, 0, 0], sizes = [8, 2, 1], strides = [1, 1, 1]} : vector<8x2x2xf32> to vector<8x2x1xf32>
    %6 = vector.extract_strided_slice %1 {offsets = [0, 0], sizes = [1, 16], strides = [1, 1]} : vector<2x16xf32> to vector<1x16xf32>
    %7 = vector.shape_cast %6 : vector<1x16xf32> to vector<1x1x16xf32>
    %8 = vector.broadcast %5 : vector<8x2x1xf32> to vector<8x2x16xf32>
    %9 = vector.broadcast %7 : vector<1x1x16xf32> to vector<8x2x16xf32>
    %10 = arith.mulf %8, %9 : vector<8x2x16xf32>
    %11 = vector.broadcast %4 : vector<1x1x16xf32> to vector<8x2x16xf32>
    %12 = arith.addf %11, %10 : vector<8x2x16xf32>
    %13 = vector.extract_strided_slice %0 {offsets = [0, 0, 1], sizes = [8, 2, 1], strides = [1, 1, 1]} : vector<8x2x2xf32> to vector<8x2x1xf32>
    %14 = vector.extract_strided_slice %1 {offsets = [1, 0], sizes = [1, 16], strides = [1, 1]} : vector<2x16xf32> to vector<1x16xf32>
    %15 = vector.shape_cast %14 : vector<1x16xf32> to vector<1x1x16xf32>
    %16 = vector.broadcast %13 : vector<8x2x1xf32> to vector<8x2x16xf32>
    %17 = vector.broadcast %15 : vector<1x1x16xf32> to vector<8x2x16xf32>
    %18 = arith.mulf %16, %17 : vector<8x2x16xf32>
    %19 = arith.addf %12, %18 : vector<8x2x16xf32>
    %c0_8 = arith.constant 0 : index
    %c0_9 = arith.constant 0 : index
    %c0_10 = arith.constant 0 : index
    %20 = vector.load %arg9[%c0_8, %c0_9, %c0_10] : memref<8x2x16xf32, #tpu.memory_space<vmem>>, vector<8x2x16xf32>
    tpu.vector_store %arg9[%c0_8, %c0_9, %c0_10], %19 {strides = array<i32>} : memref<8x2x16xf32, #tpu.memory_space<vmem>>, vector<8x2x16xf32>,
    %c0_11 = arith.constant 0 : index
    %c0_12 = arith.constant 0 : index
    %21 = vector.load %arg1[%c0_11, %c0_12] : memref<2x16xf32, #tpu.memory_space<vmem>>, vector<2x16xf32>
    %c0_i32 = arith.constant 0 : i32
    %22 = arith.index_cast %c0_i32 : i32 to index
    %c0_13 = arith.constant 0 : index
    %c0_14 = arith.constant 0 : index
    %23 = vector.load %arg9[%22, %c0_13, %c0_14] : memref<8x2x16xf32, #tpu.memory_space<vmem>>, vector<1x2x16xf32>
    %24 = vector.shape_cast %23 : vector<1x2x16xf32> to vector<2x16xf32>
    %cst = arith.constant dense<0.000000e+00> : vector<2x16xf32>
    %25 = tpu.matmul %21, %2, %cst {dimension_numbers = #tpu.dot_dimension_numbers<[1], [0], [0], [1], [0, 0, 1, 1], [], []>} : vector<2x16xf32>, vector<16x16xf32>, vector<2x16xf32> -> vector<2x16xf32>
    %26 = arith.addf %24, %25 : vector<2x16xf32>
    %27 = math.tanh %26 : vector<2x16xf32>
    %28 = arith.index_cast %c0_i32 : i32 to index
    %c0_15 = arith.constant 0 : index
    %c0_16 = arith.constant 0 : index
    %29 = vector.load %arg9[%28, %c0_15, %c0_16] : memref<8x2x16xf32, #tpu.memory_space<vmem>>, vector<1x2x16xf32>
    %30 = vector.shape_cast %29 : vector<1x2x16xf32> to vector<2x16xf32>
    %31 = vector.shape_cast %27 : vector<2x16xf32> to vector<1x2x16xf32>
    tpu.vector_store %arg9[%28, %c0_15, %c0_16], %31 {strides = array<i32>} : memref<8x2x16xf32, #tpu.memory_space<vmem>>, vector<1x2x16xf32>,
    %c1_i32 = arith.constant 1 : i32
    %32 = arith.index_cast %c1_i32 : i32 to index
    %c0_17 = arith.constant 0 : index
    %c0_18 = arith.constant 0 : index
    %33 = vector.load %arg9[%32, %c0_17, %c0_18] : memref<8x2x16xf32, #tpu.memory_space<vmem>>, vector<1x2x16xf32>
    %34 = vector.shape_cast %33 : vector<1x2x16xf32> to vector<2x16xf32>
    %cst_19 = arith.constant dense<0.000000e+00> : vector<2x16xf32>
    %35 = tpu.matmul %27, %2, %cst_19 {dimension_numbers = #tpu.dot_dimension_numbers<[1], [0], [0], [1], [0, 0, 1, 1], [], []>} : vector<2x16xf32>, vector<16x16xf32>, vector<2x16xf32> -> vector<2x16xf32>
    %36 = arith.addf %34, %35 : vector<2x16xf32>
    %37 = math.tanh %36 : vector<2x16xf32>
    %38 = arith.index_cast %c1_i32 : i32 to index
    %c0_20 = arith.constant 0 : index
    %c0_21 = arith.constant 0 : index
    %39 = vector.load %arg9[%38, %c0_20, %c0_21] : memref<8x2x16xf32, #tpu.memory_space<vmem>>, vector<1x2x16xf32>
    %40 = vector.shape_cast %39 : vector<1x2x16xf32> to vector<2x16xf32>
    %41 = vector.shape_cast %37 : vector<2x16xf32> to vector<1x2x16xf32>
    tpu.vector_store %arg9[%38, %c0_20, %c0_21], %41 {strides = array<i32>} : memref<8x2x16xf32, #tpu.memory_space<vmem>>, vector<1x2x16xf32>,
    %c2_i32 = arith.constant 2 : i32
    %42 = arith.index_cast %c2_i32 : i32 to index
    %c0_22 = arith.constant 0 : index
    %c0_23 = arith.constant 0 : index
    %43 = vector.load %arg9[%42, %c0_22, %c0_23] : memref<8x2x16xf32, #tpu.memory_space<vmem>>, vector<1x2x16xf32>
    %44 = vector.shape_cast %43 : vector<1x2x16xf32> to vector<2x16xf32>
    %cst_24 = arith.constant dense<0.000000e+00> : vector<2x16xf32>
    %45 = tpu.matmul %37, %2, %cst_24 {dimension_numbers = #tpu.dot_dimension_numbers<[1], [0], [0], [1], [0, 0, 1, 1], [], []>} : vector<2x16xf32>, vector<16x16xf32>, vector<2x16xf32> -> vector<2x16xf32>
    %46 = arith.addf %44, %45 : vector<2x16xf32>
    %47 = math.tanh %46 : vector<2x16xf32>
    %48 = arith.index_cast %c2_i32 : i32 to index
    %c0_25 = arith.constant 0 : index
    %c0_26 = arith.constant 0 : index
    %49 = vector.load %arg9[%48, %c0_25, %c0_26] : memref<8x2x16xf32, #tpu.memory_space<vmem>>, vector<1x2x16xf32>
    %50 = vector.shape_cast %49 : vector<1x2x16xf32> to vector<2x16xf32>
    %51 = vector.shape_cast %47 : vector<2x16xf32> to vector<1x2x16xf32>
    tpu.vector_store %arg9[%48, %c0_25, %c0_26], %51 {strides = array<i32>} : memref<8x2x16xf32, #tpu.memory_space<vmem>>, vector<1x2x16xf32>,
    %c3_i32 = arith.constant 3 : i32
    %52 = arith.index_cast %c3_i32 : i32 to index
    %c0_27 = arith.constant 0 : index
    %c0_28 = arith.constant 0 : index
    %53 = vector.load %arg9[%52, %c0_27, %c0_28] : memref<8x2x16xf32, #tpu.memory_space<vmem>>, vector<1x2x16xf32>
    %54 = vector.shape_cast %53 : vector<1x2x16xf32> to vector<2x16xf32>
    %cst_29 = arith.constant dense<0.000000e+00> : vector<2x16xf32>
    %55 = tpu.matmul %47, %2, %cst_29 {dimension_numbers = #tpu.dot_dimension_numbers<[1], [0], [0], [1], [0, 0, 1, 1], [], []>} : vector<2x16xf32>, vector<16x16xf32>, vector<2x16xf32> -> vector<2x16xf32>
    %56 = arith.addf %54, %55 : vector<2x16xf32>
    %57 = math.tanh %56 : vector<2x16xf32>
    %58 = arith.index_cast %c3_i32 : i32 to index
    %c0_30 = arith.constant 0 : index
    %c0_31 = arith.constant 0 : index
    %59 = vector.load %arg9[%58, %c0_30, %c0_31] : memref<8x2x16xf32, #tpu.memory_space<vmem>>, vector<1x2x16xf32>
    %60 = vector.shape_cast %59 : vector<1x2x16xf32> to vector<2x16xf32>
    %61 = vector.shape_cast %57 : vector<2x16xf32> to vector<1x2x16xf32>
    tpu.vector_store %arg9[%58, %c0_30, %c0_31], %61 {strides = array<i32>} : memref<8x2x16xf32, #tpu.memory_space<vmem>>, vector<1x2x16xf32>,
    %c4_i32 = arith.constant 4 : i32
    %62 = arith.index_cast %c4_i32 : i32 to index
    %c0_32 = arith.constant 0 : index
    %c0_33 = arith.constant 0 : index
    %63 = vector.load %arg9[%62, %c0_32, %c0_33] : memref<8x2x16xf32, #tpu.memory_space<vmem>>, vector<1x2x16xf32>
    %64 = vector.shape_cast %63 : vector<1x2x16xf32> to vector<2x16xf32>
    %cst_34 = arith.constant dense<0.000000e+00> : vector<2x16xf32>
    %65 = tpu.matmul %57, %2, %cst_34 {dimension_numbers = #tpu.dot_dimension_numbers<[1], [0], [0], [1], [0, 0, 1, 1], [], []>} : vector<2x16xf32>, vector<16x16xf32>, vector<2x16xf32> -> vector<2x16xf32>
    %66 = arith.addf %64, %65 : vector<2x16xf32>
    %67 = math.tanh %66 : vector<2x16xf32>
    %68 = arith.index_cast %c4_i32 : i32 to index
    %c0_35 = arith.constant 0 : index
    %c0_36 = arith.constant 0 : index
    %69 = vector.load %arg9[%68, %c0_35, %c0_36] : memref<8x2x16xf32, #tpu.memory_space<vmem>>, vector<1x2x16xf32>
    %70 = vector.shape_cast %69 : vector<1x2x16xf32> to vector<2x16xf32>
    %71 = vector.shape_cast %67 : vector<2x16xf32> to vector<1x2x16xf32>
    tpu.vector_store %arg9[%68, %c0_35, %c0_36], %71 {strides = array<i32>} : memref<8x2x16xf32, #tpu.memory_space<vmem>>, vector<1x2x16xf32>,
    %c5_i32 = arith.constant 5 : i32
    %72 = arith.index_cast %c5_i32 : i32 to index
    %c0_37 = arith.constant 0 : index
    %c0_38 = arith.constant 0 : index
    %73 = vector.load %arg9[%72, %c0_37, %c0_38] : memref<8x2x16xf32, #tpu.memory_space<vmem>>, vector<1x2x16xf32>
    %74 = vector.shape_cast %73 : vector<1x2x16xf32> to vector<2x16xf32>
    %cst_39 = arith.constant dense<0.000000e+00> : vector<2x16xf32>
    %75 = tpu.matmul %67, %2, %cst_39 {dimension_numbers = #tpu.dot_dimension_numbers<[1], [0], [0], [1], [0, 0, 1, 1], [], []>} : vector<2x16xf32>, vector<16x16xf32>, vector<2x16xf32> -> vector<2x16xf32>
    %76 = arith.addf %74, %75 : vector<2x16xf32>
    %77 = math.tanh %76 : vector<2x16xf32>
    %78 = arith.index_cast %c5_i32 : i32 to index
    %c0_40 = arith.constant 0 : index
    %c0_41 = arith.constant 0 : index
    %79 = vector.load %arg9[%78, %c0_40, %c0_41] : memref<8x2x16xf32, #tpu.memory_space<vmem>>, vector<1x2x16xf32>
    %80 = vector.shape_cast %79 : vector<1x2x16xf32> to vector<2x16xf32>
    %81 = vector.shape_cast %77 : vector<2x16xf32> to vector<1x2x16xf32>
    tpu.vector_store %arg9[%78, %c0_40, %c0_41], %81 {strides = array<i32>} : memref<8x2x16xf32, #tpu.memory_space<vmem>>, vector<1x2x16xf32>,
    %c6_i32 = arith.constant 6 : i32
    %82 = arith.index_cast %c6_i32 : i32 to index
    %c0_42 = arith.constant 0 : index
    %c0_43 = arith.constant 0 : index
    %83 = vector.load %arg9[%82, %c0_42, %c0_43] : memref<8x2x16xf32, #tpu.memory_space<vmem>>, vector<1x2x16xf32>
    %84 = vector.shape_cast %83 : vector<1x2x16xf32> to vector<2x16xf32>
    %cst_44 = arith.constant dense<0.000000e+00> : vector<2x16xf32>
    %85 = tpu.matmul %77, %2, %cst_44 {dimension_numbers = #tpu.dot_dimension_numbers<[1], [0], [0], [1], [0, 0, 1, 1], [], []>} : vector<2x16xf32>, vector<16x16xf32>, vector<2x16xf32> -> vector<2x16xf32>
    %86 = arith.addf %84, %85 : vector<2x16xf32>
    %87 = math.tanh %86 : vector<2x16xf32>
    %88 = arith.index_cast %c6_i32 : i32 to index
    %c0_45 = arith.constant 0 : index
    %c0_46 = arith.constant 0 : index
    %89 = vector.load %arg9[%88, %c0_45, %c0_46] : memref<8x2x16xf32, #tpu.memory_space<vmem>>, vector<1x2x16xf32>
    %90 = vector.shape_cast %89 : vector<1x2x16xf32> to vector<2x16xf32>
    %91 = vector.shape_cast %87 : vector<2x16xf32> to vector<1x2x16xf32>
    tpu.vector_store %arg9[%88, %c0_45, %c0_46], %91 {strides = array<i32>} : memref<8x2x16xf32, #tpu.memory_space<vmem>>, vector<1x2x16xf32>,
    %c7_i32 = arith.constant 7 : i32
    %92 = arith.index_cast %c7_i32 : i32 to index
    %c0_47 = arith.constant 0 : index
    %c0_48 = arith.constant 0 : index
    %93 = vector.load %arg9[%92, %c0_47, %c0_48] : memref<8x2x16xf32, #tpu.memory_space<vmem>>, vector<1x2x16xf32>
    %94 = vector.shape_cast %93 : vector<1x2x16xf32> to vector<2x16xf32>
    %cst_49 = arith.constant dense<0.000000e+00> : vector<2x16xf32>
    %95 = tpu.matmul %87, %2, %cst_49 {dimension_numbers = #tpu.dot_dimension_numbers<[1], [0], [0], [1], [0, 0, 1, 1], [], []>} : vector<2x16xf32>, vector<16x16xf32>, vector<2x16xf32> -> vector<2x16xf32>
    %96 = arith.addf %94, %95 : vector<2x16xf32>
    %97 = math.tanh %96 : vector<2x16xf32>
    %98 = arith.index_cast %c7_i32 : i32 to index
    %c0_50 = arith.constant 0 : index
    %c0_51 = arith.constant 0 : index
    %99 = vector.load %arg9[%98, %c0_50, %c0_51] : memref<8x2x16xf32, #tpu.memory_space<vmem>>, vector<1x2x16xf32>
    %100 = vector.shape_cast %99 : vector<1x2x16xf32> to vector<2x16xf32>
    %101 = vector.shape_cast %97 : vector<2x16xf32> to vector<1x2x16xf32>
    tpu.vector_store %arg9[%98, %c0_50, %c0_51], %101 {strides = array<i32>} : memref<8x2x16xf32, #tpu.memory_space<vmem>>, vector<1x2x16xf32>,
    %c8_i32 = arith.constant 8 : i32
    %c0_52 = arith.constant 0 : index
    %c0_53 = arith.constant 0 : index
    %102 = vector.load %arg8[%c0_52, %c0_53] : memref<2x16xf32, #tpu.memory_space<vmem>>, vector<2x16xf32>
    tpu.vector_store %arg8[%c0_52, %c0_53], %97 {strides = array<i32>} : memref<2x16xf32, #tpu.memory_space<vmem>>, vector<2x16xf32>,
    %c0_54 = arith.constant 0 : index
    %c0_55 = arith.constant 0 : index
    %c0_56 = arith.constant 0 : index
    %103 = vector.load %arg9[%c0_54, %c0_55, %c0_56] : memref<8x2x16xf32, #tpu.memory_space<vmem>>, vector<8x2x16xf32>
    %cst_57 = arith.constant 0.000000e+00 : f32
    %104 = vector.broadcast %cst_57 : f32 to vector<8x2x16xf32>
    %105 = arith.maximumf %103, %104 : vector<8x2x16xf32>
    %c0_58 = arith.constant 0 : index
    %c0_59 = arith.constant 0 : index
    %106 = vector.load %arg5[%c0_58, %c0_59] : memref<1x16xf32, #tpu.memory_space<vmem>>, vector<1x16xf32>
    %107 = vector.shape_cast %106 : vector<1x16xf32> to vector<1x1x16xf32>
    %108 = vector.broadcast %107 : vector<1x1x16xf32> to vector<8x2x16xf32>
    %109 = arith.mulf %105, %108 : vector<8x2x16xf32>
    %cst_60 = arith.constant dense<0.000000e+00> : vector<8x2xf32>
    %110 = vector.multi_reduction <add>, %109, %cst_60 [2] : vector<8x2x16xf32> to vector<8x2xf32>
    %c0_61 = arith.constant 0 : index
    %c0_62 = arith.constant 0 : index
    %111 = vector.load %arg6[%c0_61, %c0_62] : memref<1x1xf32, #tpu.memory_space<vmem>>, vector<1x1xf32>
    %112 = vector.broadcast %111 : vector<1x1xf32> to vector<8x2xf32>
    %113 = arith.addf %110, %112 : vector<8x2xf32>
    %114 = arith.negf %113 : vector<8x2xf32>
    %115 = math.exp %114 : vector<8x2xf32>
    %cst_63 = arith.constant 1.000000e+00 : f32
    %116 = vector.broadcast %cst_63 : f32 to vector<8x2xf32>
    %117 = arith.addf %116, %115 : vector<8x2xf32>
    %118 = arith.divf %116, %117 : vector<8x2xf32>
    %c0_64 = arith.constant 0 : index
    %c0_65 = arith.constant 0 : index
    %119 = vector.load %arg7[%c0_64, %c0_65] : memref<8x2xf32, #tpu.memory_space<vmem>>, vector<8x2xf32>
    tpu.vector_store %arg7[%c0_64, %c0_65], %118 {strides = array<i32>} : memref<8x2xf32, #tpu.memory_space<vmem>>, vector<8x2xf32>,
    return
  }
}

</mosaic_0001>

<llo_original>
// kernel: rnn_net_forward.1
$region0: #{rnn_net_forward.1}
  #allocation0 [shape = 'u32[]', space=smem, size = 0x4, offset = 0x4, fixed_abs, tag = 'smem constant byte address 0x4 - core index']
  #allocation1 [shape = 'u32[144,128]{1,0:T(1,128)}', space=vmem, size = 0x12000, scoped, tag = 'internal scratch']
  #allocation2 [shape = 'f32[8,2,16]{2,1,0:T(2,128)}', space=vmem, size = 0x2000, scoped, tag = 'scratch operand']
  #allocation3 [shape = 'f32[1,1]{1,0:T(1,128)S(1)}', space=vmem, size = 0x200, scoped, tag = 'scoped memory for rnn_net_forward.1']
  %s0 = inlined_call_operand.vmem [shape: f32[8,2,2], index: 0, kind: input, shape index: {}]
  %s1 = inlined_call_operand.vmem [shape: f32[2,16], index: 1, kind: input, shape index: {}]
  %s2 = inlined_call_operand.vmem [shape: f32[2,16], index: 2, kind: input, shape index: {}]
  %s3 = inlined_call_operand.vmem [shape: f32[16,16], index: 3, kind: input, shape index: {}]
  %s4 = inlined_call_operand.vmem [shape: f32[1,16], index: 4, kind: input, shape index: {}]
  %s5 = inlined_call_operand.vmem [shape: f32[1,16], index: 5, kind: input, shape index: {}]
  %s6 = inlined_call_operand.<no memory space> [shape: f32[1,1], index: 6, kind: input, shape index: {}]
  %s7 = inlined_call_operand.vmem [shape: f32[8,2], index: 7, kind: output, shape index: {0}]
  %s8 = inlined_call_operand.hbm [shape: f32[2,16], index: 8, kind: output, shape index: {1}]
  %9 = xla_tuple %s7, %s8
  %s10 = sld [smem:[#allocation0]]
  $region46: #{rnn_net_forward.1} parent=0
    _
  %s12 = ssub.s32 1, %s10
  %s13 = scalar_select 0, %s12, %s10
  %v14 = vstv %s6
  %15 = vst [vmem:[#allocation3] sm:$0x1] %v14
  $region1: #{rnn_net_forward.1} parent=0
    #allocation4 [shape = 'u8[1024]{0}', space=vmem, size = 0x400, scoped, tag = 'output window, operand 1, single buffered']
    #allocation5 [shape = 's32[1]{0}', space=sflag, size = 0x4, scoped, tag = 'scoped memory for rnn_net_forward.1']
    %16 = vsyncpa [#allocation5], 0
    // Predicated region
    $region2: #{rnn_net_forward.1} parent=1 // pred_check
      _
    $region3: #{rnn_net_forward.1} parent=1 // pred_check_branch
      %18 = sbr.rel (0) target = $region5
    $region4: #{rnn_net_forward.1} parent=1 // pred_region
      _
    $region5: #{rnn_net_forward.1} parent=1 // pred_fallthru
      _
    // Predicated region
    $region6: #{rnn_net_forward.1} parent=1 // pred_check
      _
    $region7: #{rnn_net_forward.1} parent=1 // pred_check_branch
      %20 = sbr.rel (0) target = $region9
    $region8: #{rnn_net_forward.1} parent=1 // pred_region
      _
    $region9: #{rnn_net_forward.1} parent=1 // pred_fallthru
      _
    // Predicated region
    $region10: #{rnn_net_forward.1} parent=1 // pred_check
      _
    $region11: #{rnn_net_forward.1} parent=1 // pred_check_branch
      %22 = sbr.rel (0) target = $region13
    $region12: #{rnn_net_forward.1} parent=1 // pred_region
      _
    $region13: #{rnn_net_forward.1} parent=1 // pred_fallthru
      _
    // Predicated region
    $region14: #{rnn_net_forward.1} parent=1 // pred_check
      _
    $region15: #{rnn_net_forward.1} parent=1 // pred_check_branch
      %24 = sbr.rel (0) target = $region17
    $region16: #{rnn_net_forward.1} parent=1 // pred_region
      _
    $region17: #{rnn_net_forward.1} parent=1 // pred_fallthru
      _
    // Predicated region
    $region18: #{rnn_net_forward.1} parent=1 // pred_check
      _
    $region19: #{rnn_net_forward.1} parent=1 // pred_check_branch
      %26 = sbr.rel (0) target = $region21
    $region20: #{rnn_net_forward.1} parent=1 // pred_region
      _
    $region21: #{rnn_net_forward.1} parent=1 // pred_fallthru
      _
    // Predicated region
    $region22: #{rnn_net_forward.1} parent=1 // pred_check
      _
    $region23: #{rnn_net_forward.1} parent=1 // pred_check_branch
      %28 = sbr.rel (0) target = $region25
    $region24: #{rnn_net_forward.1} parent=1 // pred_region
      _
    $region25: #{rnn_net_forward.1} parent=1 // pred_fallthru
      _
    // Predicated region
    $region26: #{rnn_net_forward.1} parent=1 // pred_check
      _
    $region27: #{rnn_net_forward.1} parent=1 // pred_check_branch
      %30 = sbr.rel (0) target = $region29
    $region28: #{rnn_net_forward.1} parent=1 // pred_region
      _
    $region29: #{rnn_net_forward.1} parent=1 // pred_fallthru
      _
    %v31 = vld [vmem:[%s0] sm:$0x3]
    %v32 = vld [vmem:[%s0 + $0x2] sm:$0x3]
    %v33 = vld [vmem:[%s0 + $0x4] sm:$0x3]
    %v34 = vld [vmem:[%s0 + $0x6] sm:$0x3]
    %v35 = vld [vmem:[%s0 + $0x8] sm:$0x3]
    %v36 = vld [vmem:[%s0 + $0xa] sm:$0x3]
    %v37 = vld [vmem:[%s0 + $0xc] sm:$0x3]
    %v38 = vld [vmem:[%s0 + $0xe] sm:$0x3]
    %v39 = vld [vmem:[%s2] sm:$0x3]
    %v40 = vld [vmem:[%s3] sm:$0xff]
    %v41 = vld [vmem:[%s3 + $0x8] sm:$0xff]
    %v42 = vld [vmem:[%s4] sm:$0x1]
    %44 = vset.pattern.permute.xlu0 0
    %45 = vperm.xlu0 %44, %v31
    %v46 = vpop.permute.xlu0 %45
    %49 = vset.pattern.permute.xlu0 0
    %50 = vperm.xlu0 %49, %v32
    %v51 = vpop.permute.xlu0 %50
    %54 = vset.pattern.permute.xlu0 0
    %55 = vperm.xlu0 %54, %v33
    %v56 = vpop.permute.xlu0 %55
    %59 = vset.pattern.permute.xlu0 0
    %60 = vperm.xlu0 %59, %v34
    %v61 = vpop.permute.xlu0 %60
    %64 = vset.pattern.permute.xlu0 0
    %65 = vperm.xlu0 %64, %v35
    %v66 = vpop.permute.xlu0 %65
    %69 = vset.pattern.permute.xlu0 0
    %70 = vperm.xlu0 %69, %v36
    %v71 = vpop.permute.xlu0 %70
    %74 = vset.pattern.permute.xlu0 0
    %75 = vperm.xlu0 %74, %v37
    %v76 = vpop.permute.xlu0 %75
    %79 = vset.pattern.permute.xlu0 0
    %80 = vperm.xlu0 %79, %v38
    %v81 = vpop.permute.xlu0 %80
    %v83 = vlaneseq
    %v84 = vshrl.u32 %v83, 7
    %v85 = vsub.s32 0, %v84
    %v86 = vrot.slane %v39, %v85
    %v87 = vmul.f32 %v46, %v86
    %v88 = vmul.f32 %v51, %v86
    %v89 = vmul.f32 %v56, %v86
    %v90 = vmul.f32 %v61, %v86
    %v91 = vmul.f32 %v66, %v86
    %v92 = vmul.f32 %v71, %v86
    %v93 = vmul.f32 %v76, %v86
    %v94 = vmul.f32 %v81, %v86
    %v96 = vlaneseq
    %v97 = vshrl.u32 %v96, 7
    %v98 = vsub.s32 0, %v97
    %v99 = vrot.slane %v42, %v98
    %v101 = vadd.f32 %v99, %v87
    %v102 = vadd.f32 %v99, %v88
    %v103 = vadd.f32 %v99, %v89
    %v104 = vadd.f32 %v99, %v90
    %v105 = vadd.f32 %v99, %v91
    %v106 = vadd.f32 %v99, %v92
    %v107 = vadd.f32 %v99, %v93
    %v108 = vadd.f32 %v99, %v94
    %109 = vset.pattern.permute.xlu0 1
    %110 = vperm.xlu0 %109, %v31
    %v111 = vpop.permute.xlu0 %110
    %113 = vset.pattern.permute.xlu0 1
    %114 = vperm.xlu0 %113, %v32
    %v115 = vpop.permute.xlu0 %114
    %117 = vset.pattern.permute.xlu0 1
    %118 = vperm.xlu0 %117, %v33
    %v119 = vpop.permute.xlu0 %118
    %121 = vset.pattern.permute.xlu0 1
    %122 = vperm.xlu0 %121, %v34
    %v123 = vpop.permute.xlu0 %122
    %125 = vset.pattern.permute.xlu0 1
    %126 = vperm.xlu0 %125, %v35
    %v127 = vpop.permute.xlu0 %126
    %129 = vset.pattern.permute.xlu0 1
    %130 = vperm.xlu0 %129, %v36
    %v131 = vpop.permute.xlu0 %130
    %133 = vset.pattern.permute.xlu0 1
    %134 = vperm.xlu0 %133, %v37
    %v135 = vpop.permute.xlu0 %134
    %137 = vset.pattern.permute.xlu0 1
    %138 = vperm.xlu0 %137, %v38
    %v139 = vpop.permute.xlu0 %138
    %v141 = vlaneseq
    %v142 = vshrl.u32 %v141, 7
    %v143 = vsub.s32 1, %v142
    %v144 = vrot.slane %v39, %v143
    %v145 = vmul.f32 %v111, %v144
    %v146 = vmul.f32 %v115, %v144
    %v147 = vmul.f32 %v119, %v144
    %v148 = vmul.f32 %v123, %v144
    %v149 = vmul.f32 %v127, %v144
    %v150 = vmul.f32 %v131, %v144
    %v151 = vmul.f32 %v135, %v144
    %v152 = vmul.f32 %v139, %v144
    %v153 = vadd.f32 %v101, %v145
    %v154 = vadd.f32 %v102, %v146
    %v155 = vadd.f32 %v103, %v147
    %v156 = vadd.f32 %v104, %v148
    %v157 = vadd.f32 %v105, %v149
    %v158 = vadd.f32 %v106, %v150
    %v159 = vadd.f32 %v107, %v151
    %v160 = vadd.f32 %v108, %v152
    %vm161 = vcmask 123904
    %162 = vst.msk [vmem:[#allocation2] sm:$0x3] %vm161, %v153
    %163 = vst.msk [vmem:[#allocation2 + $0x2] sm:$0x3] %vm161, %v154
    %164 = vst.msk [vmem:[#allocation2 + $0x4] sm:$0x3] %vm161, %v155
    %165 = vst.msk [vmem:[#allocation2 + $0x6] sm:$0x3] %vm161, %v156
    %166 = vst.msk [vmem:[#allocation2 + $0x8] sm:$0x3] %vm161, %v157
    %167 = vst.msk [vmem:[#allocation2 + $0xa] sm:$0x3] %vm161, %v158
    %168 = vst.msk [vmem:[#allocation2 + $0xc] sm:$0x3] %vm161, %v159
    %169 = vst.msk [vmem:[#allocation2 + $0xe] sm:$0x3] %vm161, %v160
    %v170 = vld [vmem:[%s1] sm:$0x3]
    %v171 = vld [vmem:[#allocation2] sm:$0x3]
    %vm172 = vcmask 130048
    %v174 = vsel %vm172, %v170, 0
    %176 = vmatprep.subr.mxu0 0.0
    %177 = vmatpush1.msra.mxu0 %v40
    %178 = vmatprep.subr.mxu0 0.0
    %179 = vmatpush1.msra.mxu0 %v41
    %180 = vmatprep.subr.mxu0 0.0
    %181 = vmatpush1.msra.mxu0 0.0
    %182 = vmatprep.subr.mxu0 0.0
    %183 = vmatpush1.msra.mxu0 0.0
    %184 = vmatprep.subr.mxu0 0.0
    %185 = vmatpush1.msra.mxu0 0.0
    %186 = vmatprep.subr.mxu0 0.0
    %187 = vmatpush1.msra.mxu0 0.0
    %188 = vmatprep.subr.mxu0 0.0
    %189 = vmatpush1.msra.mxu0 0.0
    %190 = vmatprep.subr.mxu0 0.0
    %191 = vmatpush1.msra.mxu0 0.0
    %192 = vmatprep.subr.mxu0 0.0
    %193 = vmatpush1.msra.mxu0 0.0
    %194 = vmatprep.subr.mxu0 0.0
    %195 = vmatpush1.msra.mxu0 0.0
    %196 = vmatprep.subr.mxu0 0.0
    %197 = vmatpush1.msra.mxu0 0.0
    %198 = vmatprep.subr.mxu0 0.0
    %199 = vmatpush1.msra.mxu0 0.0
    %200 = vmatprep.subr.mxu0 0.0
    %201 = vmatpush1.msra.mxu0 0.0
    %202 = vmatprep.subr.mxu0 0.0
    %203 = vmatpush1.msra.mxu0 0.0
    %204 = vmatprep.subr.mxu0 0.0
    %205 = vmatpush1.msra.mxu0 0.0
    %206 = vmatprep.subr.mxu0 0.0
    %207 = vmatpush1.msra.mxu0 0.0
    %208 = vmatprep.subr.mxu0 0.0
    %209 = vmatpush1.msra.mxu0 0.0
    %210 = vmatprep.subr.mxu0 0.0
    %211 = vmatpush1.msra.mxu0 0.0
    %212 = vmatprep.subr.mxu0 0.0
    %213 = vmatpush1.msra.mxu0 0.0
    %214 = vmatprep.subr.mxu0 0.0
    %215 = vmatpush1.msra.mxu0 0.0
    %216 = vmatprep.subr.mxu0 0.0
    %217 = vmatpush1.msra.mxu0 0.0
    %218 = vmatprep.subr.mxu0 0.0
    %219 = vmatpush1.msra.mxu0 0.0
    %220 = vmatprep.subr.mxu0 0.0
    %221 = vmatpush1.msra.mxu0 0.0
    %222 = vmatprep.subr.mxu0 0.0
    %223 = vmatpush1.msra.mxu0 0.0
    %224 = vmatprep.subr.mxu0 0.0
    %225 = vmatpush1.msra.mxu0 0.0
    %226 = vmatprep.subr.mxu0 0.0
    %227 = vmatpush1.msra.mxu0 0.0
    %228 = vmatprep.subr.mxu0 0.0
    %229 = vmatpush1.msra.mxu0 0.0
    %230 = vmatprep.subr.mxu0 0.0
    %231 = vmatpush1.msra.mxu0 0.0
    %232 = vmatprep.subr.mxu0 0.0
    %233 = vmatpush1.msra.mxu0 0.0
    %234 = vmatprep.subr.mxu0 0.0
    %235 = vmatpush1.msra.mxu0 0.0
    %236 = vmatprep.subr.mxu0 0.0
    %237 = vmatpush1.msra.mxu0 0.0
    %238 = vmatprep.subr.mxu0 0.0
    %239 = vmatpush1.msra.mxu0 0.0
    %240 = vmatprep.mubr.f32.mxu0 0.0
    %241 = vmatmul.mubr.f32.gmra.mrb[0].mxu0 %v174
    %v242 = vpop.f32.mrb[0].mxu0
    %v243 = vadd.f32 0.0, %v242
    %v244 = vpop.f32.mrb[0].mxu0
    %245 = vdwg.mxu0
    %v246 = vadd.f32 %v171, %v243
    %v247 = vtanh.pop %v246
    %248 = vst.msk [vmem:[#allocation2] sm:$0x3] %vm161, %v247
    %s249 = scalar_lea.vmem [#allocation2], 2
    %v250 = vld [vmem:[%s249] sm:$0x3]
    %v252 = vsel %vm172, %v247, 0
    %254 = vmatprep.subr.mxu0 0.0
    %255 = vmatpush1.msra.mxu0 %v40
    %256 = vmatprep.subr.mxu0 0.0
    %257 = vmatpush1.msra.mxu0 %v41
    %258 = vmatprep.subr.mxu0 0.0
    %259 = vmatpush1.msra.mxu0 0.0
    %260 = vmatprep.subr.mxu0 0.0
    %261 = vmatpush1.msra.mxu0 0.0
    %262 = vmatprep.subr.mxu0 0.0
    %263 = vmatpush1.msra.mxu0 0.0
    %264 = vmatprep.subr.mxu0 0.0
    %265 = vmatpush1.msra.mxu0 0.0
    %266 = vmatprep.subr.mxu0 0.0
    %267 = vmatpush1.msra.mxu0 0.0
    %268 = vmatprep.subr.mxu0 0.0
    %269 = vmatpush1.msra.mxu0 0.0
    %270 = vmatprep.subr.mxu0 0.0
    %271 = vmatpush1.msra.mxu0 0.0
    %272 = vmatprep.subr.mxu0 0.0
    %273 = vmatpush1.msra.mxu0 0.0
    %274 = vmatprep.subr.mxu0 0.0
    %275 = vmatpush1.msra.mxu0 0.0
    %276 = vmatprep.subr.mxu0 0.0
    %277 = vmatpush1.msra.mxu0 0.0
    %278 = vmatprep.subr.mxu0 0.0
    %279 = vmatpush1.msra.mxu0 0.0
    %280 = vmatprep.subr.mxu0 0.0
    %281 = vmatpush1.msra.mxu0 0.0
    %282 = vmatprep.subr.mxu0 0.0
    %283 = vmatpush1.msra.mxu0 0.0
    %284 = vmatprep.subr.mxu0 0.0
    %285 = vmatpush1.msra.mxu0 0.0
    %286 = vmatprep.subr.mxu0 0.0
    %287 = vmatpush1.msra.mxu0 0.0
    %288 = vmatprep.subr.mxu0 0.0
    %289 = vmatpush1.msra.mxu0 0.0
    %290 = vmatprep.subr.mxu0 0.0
    %291 = vmatpush1.msra.mxu0 0.0
    %292 = vmatprep.subr.mxu0 0.0
    %293 = vmatpush1.msra.mxu0 0.0
    %294 = vmatprep.subr.mxu0 0.0
    %295 = vmatpush1.msra.mxu0 0.0
    %296 = vmatprep.subr.mxu0 0.0
    %297 = vmatpush1.msra.mxu0 0.0
    %298 = vmatprep.subr.mxu0 0.0
    %299 = vmatpush1.msra.mxu0 0.0
    %300 = vmatprep.subr.mxu0 0.0
    %301 = vmatpush1.msra.mxu0 0.0
    %302 = vmatprep.subr.mxu0 0.0
    %303 = vmatpush1.msra.mxu0 0.0
    %304 = vmatprep.subr.mxu0 0.0
    %305 = vmatpush1.msra.mxu0 0.0
    %306 = vmatprep.subr.mxu0 0.0
    %307 = vmatpush1.msra.mxu0 0.0
    %308 = vmatprep.subr.mxu0 0.0
    %309 = vmatpush1.msra.mxu0 0.0
    %310 = vmatprep.subr.mxu0 0.0
    %311 = vmatpush1.msra.mxu0 0.0
    %312 = vmatprep.subr.mxu0 0.0
    %313 = vmatpush1.msra.mxu0 0.0
    %314 = vmatprep.subr.mxu0 0.0
    %315 = vmatpush1.msra.mxu0 0.0
    %316 = vmatprep.subr.mxu0 0.0
    %317 = vmatpush1.msra.mxu0 0.0
    %318 = vmatprep.mubr.f32.mxu0 0.0
    %319 = vmatmul.mubr.f32.gmra.mrb[0].mxu0 %v252
    %v320 = vpop.f32.mrb[0].mxu0
    %v321 = vadd.f32 0.0, %v320
    %v322 = vpop.f32.mrb[0].mxu0
    %323 = vdwg.mxu0
    %v324 = vadd.f32 %v250, %v321
    %v325 = vtanh.pop %v324
    %326 = vst.msk [vmem:[%s249] sm:$0x3] %vm161, %v325
    %s327 = scalar_lea.vmem [#allocation2], 4
    %v328 = vld [vmem:[%s327] sm:$0x3]
    %v330 = vsel %vm172, %v325, 0
    %332 = vmatprep.subr.mxu0 0.0
    %333 = vmatpush1.msra.mxu0 %v40
    %334 = vmatprep.subr.mxu0 0.0
    %335 = vmatpush1.msra.mxu0 %v41
    %336 = vmatprep.subr.mxu0 0.0
    %337 = vmatpush1.msra.mxu0 0.0
    %338 = vmatprep.subr.mxu0 0.0
    %339 = vmatpush1.msra.mxu0 0.0
    %340 = vmatprep.subr.mxu0 0.0
    %341 = vmatpush1.msra.mxu0 0.0
    %342 = vmatprep.subr.mxu0 0.0
    %343 = vmatpush1.msra.mxu0 0.0
    %344 = vmatprep.subr.mxu0 0.0
    %345 = vmatpush1.msra.mxu0 0.0
    %346 = vmatprep.subr.mxu0 0.0
    %347 = vmatpush1.msra.mxu0 0.0
    %348 = vmatprep.subr.mxu0 0.0
    %349 = vmatpush1.msra.mxu0 0.0
    %350 = vmatprep.subr.mxu0 0.0
    %351 = vmatpush1.msra.mxu0 0.0
    %352 = vmatprep.subr.mxu0 0.0
    %353 = vmatpush1.msra.mxu0 0.0
    %354 = vmatprep.subr.mxu0 0.0
    %355 = vmatpush1.msra.mxu0 0.0
    %356 = vmatprep.subr.mxu0 0.0
    %357 = vmatpush1.msra.mxu0 0.0
    %358 = vmatprep.subr.mxu0 0.0
    %359 = vmatpush1.msra.mxu0 0.0
    %360 = vmatprep.subr.mxu0 0.0
    %361 = vmatpush1.msra.mxu0 0.0
    %362 = vmatprep.subr.mxu0 0.0
    %363 = vmatpush1.msra.mxu0 0.0
    %364 = vmatprep.subr.mxu0 0.0
    %365 = vmatpush1.msra.mxu0 0.0
    %366 = vmatprep.subr.mxu0 0.0
    %367 = vmatpush1.msra.mxu0 0.0
    %368 = vmatprep.subr.mxu0 0.0
    %369 = vmatpush1.msra.mxu0 0.0
    %370 = vmatprep.subr.mxu0 0.0
    %371 = vmatpush1.msra.mxu0 0.0
    %372 = vmatprep.subr.mxu0 0.0
    %373 = vmatpush1.msra.mxu0 0.0
    %374 = vmatprep.subr.mxu0 0.0
    %375 = vmatpush1.msra.mxu0 0.0
    %376 = vmatprep.subr.mxu0 0.0
    %377 = vmatpush1.msra.mxu0 0.0
    %378 = vmatprep.subr.mxu0 0.0
    %379 = vmatpush1.msra.mxu0 0.0
    %380 = vmatprep.subr.mxu0 0.0
    %381 = vmatpush1.msra.mxu0 0.0
    %382 = vmatprep.subr.mxu0 0.0
    %383 = vmatpush1.msra.mxu0 0.0
    %384 = vmatprep.subr.mxu0 0.0
    %385 = vmatpush1.msra.mxu0 0.0
    %386 = vmatprep.subr.mxu0 0.0
    %387 = vmatpush1.msra.mxu0 0.0
    %388 = vmatprep.subr.mxu0 0.0
    %389 = vmatpush1.msra.mxu0 0.0
    %390 = vmatprep.subr.mxu0 0.0
    %391 = vmatpush1.msra.mxu0 0.0
    %392 = vmatprep.subr.mxu0 0.0
    %393 = vmatpush1.msra.mxu0 0.0
    %394 = vmatprep.subr.mxu0 0.0
    %395 = vmatpush1.msra.mxu0 0.0
    %396 = vmatprep.mubr.f32.mxu0 0.0
    %397 = vmatmul.mubr.f32.gmra.mrb[0].mxu0 %v330
    %v398 = vpop.f32.mrb[0].mxu0
    %v399 = vadd.f32 0.0, %v398
    %v400 = vpop.f32.mrb[0].mxu0
    %401 = vdwg.mxu0
    %v402 = vadd.f32 %v328, %v399
    %v403 = vtanh.pop %v402
    %404 = vst.msk [vmem:[%s327] sm:$0x3] %vm161, %v403
    %s405 = scalar_lea.vmem [#allocation2], 6
    %v406 = vld [vmem:[%s405] sm:$0x3]
    %v408 = vsel %vm172, %v403, 0
    %410 = vmatprep.subr.mxu0 0.0
    %411 = vmatpush1.msra.mxu0 %v40
    %412 = vmatprep.subr.mxu0 0.0
    %413 = vmatpush1.msra.mxu0 %v41
    %414 = vmatprep.subr.mxu0 0.0
    %415 = vmatpush1.msra.mxu0 0.0
    %416 = vmatprep.subr.mxu0 0.0
    %417 = vmatpush1.msra.mxu0 0.0
    %418 = vmatprep.subr.mxu0 0.0
    %419 = vmatpush1.msra.mxu0 0.0
    %420 = vmatprep.subr.mxu0 0.0
    %421 = vmatpush1.msra.mxu0 0.0
    %422 = vmatprep.subr.mxu0 0.0
    %423 = vmatpush1.msra.mxu0 0.0
    %424 = vmatprep.subr.mxu0 0.0
    %425 = vmatpush1.msra.mxu0 0.0
    %426 = vmatprep.subr.mxu0 0.0
    %427 = vmatpush1.msra.mxu0 0.0
    %428 = vmatprep.subr.mxu0 0.0
    %429 = vmatpush1.msra.mxu0 0.0
    %430 = vmatprep.subr.mxu0 0.0
    %431 = vmatpush1.msra.mxu0 0.0
    %432 = vmatprep.subr.mxu0 0.0
    %433 = vmatpush1.msra.mxu0 0.0
    %434 = vmatprep.subr.mxu0 0.0
    %435 = vmatpush1.msra.mxu0 0.0
    %436 = vmatprep.subr.mxu0 0.0
    %437 = vmatpush1.msra.mxu0 0.0
    %438 = vmatprep.subr.mxu0 0.0
    %439 = vmatpush1.msra.mxu0 0.0
    %440 = vmatprep.subr.mxu0 0.0
    %441 = vmatpush1.msra.mxu0 0.0
    %442 = vmatprep.subr.mxu0 0.0
    %443 = vmatpush1.msra.mxu0 0.0
    %444 = vmatprep.subr.mxu0 0.0
    %445 = vmatpush1.msra.mxu0 0.0
    %446 = vmatprep.subr.mxu0 0.0
    %447 = vmatpush1.msra.mxu0 0.0
    %448 = vmatprep.subr.mxu0 0.0
    %449 = vmatpush1.msra.mxu0 0.0
    %450 = vmatprep.subr.mxu0 0.0
    %451 = vmatpush1.msra.mxu0 0.0
    %452 = vmatprep.subr.mxu0 0.0
    %453 = vmatpush1.msra.mxu0 0.0
    %454 = vmatprep.subr.mxu0 0.0
    %455 = vmatpush1.msra.mxu0 0.0
    %456 = vmatprep.subr.mxu0 0.0
    %457 = vmatpush1.msra.mxu0 0.0
    %458 = vmatprep.subr.mxu0 0.0
    %459 = vmatpush1.msra.mxu0 0.0
    %460 = vmatprep.subr.mxu0 0.0
    %461 = vmatpush1.msra.mxu0 0.0
    %462 = vmatprep.subr.mxu0 0.0
    %463 = vmatpush1.msra.mxu0 0.0
    %464 = vmatprep.subr.mxu0 0.0
    %465 = vmatpush1.msra.mxu0 0.0
    %466 = vmatprep.subr.mxu0 0.0
    %467 = vmatpush1.msra.mxu0 0.0
    %468 = vmatprep.subr.mxu0 0.0
    %469 = vmatpush1.msra.mxu0 0.0
    %470 = vmatprep.subr.mxu0 0.0
    %471 = vmatpush1.msra.mxu0 0.0
    %472 = vmatprep.subr.mxu0 0.0
    %473 = vmatpush1.msra.mxu0 0.0
    %474 = vmatprep.mubr.f32.mxu0 0.0
    %475 = vmatmul.mubr.f32.gmra.mrb[0].mxu0 %v408
    %v476 = vpop.f32.mrb[0].mxu0
    %v477 = vadd.f32 0.0, %v476
    %v478 = vpop.f32.mrb[0].mxu0
    %479 = vdwg.mxu0
    %v480 = vadd.f32 %v406, %v477
    %v481 = vtanh.pop %v480
    %482 = vst.msk [vmem:[%s405] sm:$0x3] %vm161, %v481
    %s483 = scalar_lea.vmem [#allocation2], 8
    %v484 = vld [vmem:[%s483] sm:$0x3]
    %v486 = vsel %vm172, %v481, 0
    %488 = vmatprep.subr.mxu0 0.0
    %489 = vmatpush1.msra.mxu0 %v40
    %490 = vmatprep.subr.mxu0 0.0
    %491 = vmatpush1.msra.mxu0 %v41
    %492 = vmatprep.subr.mxu0 0.0
    %493 = vmatpush1.msra.mxu0 0.0
    %494 = vmatprep.subr.mxu0 0.0
    %495 = vmatpush1.msra.mxu0 0.0
    %496 = vmatprep.subr.mxu0 0.0
    %497 = vmatpush1.msra.mxu0 0.0
    %498 = vmatprep.subr.mxu0 0.0
    %499 = vmatpush1.msra.mxu0 0.0
    %500 = vmatprep.subr.mxu0 0.0
    %501 = vmatpush1.msra.mxu0 0.0
    %502 = vmatprep.subr.mxu0 0.0
    %503 = vmatpush1.msra.mxu0 0.0
    %504 = vmatprep.subr.mxu0 0.0
    %505 = vmatpush1.msra.mxu0 0.0
    %506 = vmatprep.subr.mxu0 0.0
    %507 = vmatpush1.msra.mxu0 0.0
    %508 = vmatprep.subr.mxu0 0.0
    %509 = vmatpush1.msra.mxu0 0.0
    %510 = vmatprep.subr.mxu0 0.0
    %511 = vmatpush1.msra.mxu0 0.0
    %512 = vmatprep.subr.mxu0 0.0
    %513 = vmatpush1.msra.mxu0 0.0
    %514 = vmatprep.subr.mxu0 0.0
    %515 = vmatpush1.msra.mxu0 0.0
    %516 = vmatprep.subr.mxu0 0.0
    %517 = vmatpush1.msra.mxu0 0.0
    %518 = vmatprep.subr.mxu0 0.0
    %519 = vmatpush1.msra.mxu0 0.0
    %520 = vmatprep.subr.mxu0 0.0
    %521 = vmatpush1.msra.mxu0 0.0
    %522 = vmatprep.subr.mxu0 0.0
    %523 = vmatpush1.msra.mxu0 0.0
    %524 = vmatprep.subr.mxu0 0.0
    %525 = vmatpush1.msra.mxu0 0.0
    %526 = vmatprep.subr.mxu0 0.0
    %527 = vmatpush1.msra.mxu0 0.0
    %528 = vmatprep.subr.mxu0 0.0
    %529 = vmatpush1.msra.mxu0 0.0
    %530 = vmatprep.subr.mxu0 0.0
    %531 = vmatpush1.msra.mxu0 0.0
    %532 = vmatprep.subr.mxu0 0.0
    %533 = vmatpush1.msra.mxu0 0.0
    %534 = vmatprep.subr.mxu0 0.0
    %535 = vmatpush1.msra.mxu0 0.0
    %536 = vmatprep.subr.mxu0 0.0
    %537 = vmatpush1.msra.mxu0 0.0
    %538 = vmatprep.subr.mxu0 0.0
    %539 = vmatpush1.msra.mxu0 0.0
    %540 = vmatprep.subr.mxu0 0.0
    %541 = vmatpush1.msra.mxu0 0.0
    %542 = vmatprep.subr.mxu0 0.0
    %543 = vmatpush1.msra.mxu0 0.0
    %544 = vmatprep.subr.mxu0 0.0
    %545 = vmatpush1.msra.mxu0 0.0
    %546 = vmatprep.subr.mxu0 0.0
    %547 = vmatpush1.msra.mxu0 0.0
    %548 = vmatprep.subr.mxu0 0.0
    %549 = vmatpush1.msra.mxu0 0.0
    %550 = vmatprep.subr.mxu0 0.0
    %551 = vmatpush1.msra.mxu0 0.0
    %552 = vmatprep.mubr.f32.mxu0 0.0
    %553 = vmatmul.mubr.f32.gmra.mrb[0].mxu0 %v486
    %v554 = vpop.f32.mrb[0].mxu0
    %v555 = vadd.f32 0.0, %v554
    %v556 = vpop.f32.mrb[0].mxu0
    %557 = vdwg.mxu0
    %v558 = vadd.f32 %v484, %v555
    %v559 = vtanh.pop %v558
    %560 = vst.msk [vmem:[%s483] sm:$0x3] %vm161, %v559
    %s561 = scalar_lea.vmem [#allocation2], 10
    %v562 = vld [vmem:[%s561] sm:$0x3]
    %v564 = vsel %vm172, %v559, 0
    %566 = vmatprep.subr.mxu0 0.0
    %567 = vmatpush1.msra.mxu0 %v40
    %568 = vmatprep.subr.mxu0 0.0
    %569 = vmatpush1.msra.mxu0 %v41
    %570 = vmatprep.subr.mxu0 0.0
    %571 = vmatpush1.msra.mxu0 0.0
    %572 = vmatprep.subr.mxu0 0.0
    %573 = vmatpush1.msra.mxu0 0.0
    %574 = vmatprep.subr.mxu0 0.0
    %575 = vmatpush1.msra.mxu0 0.0
    %576 = vmatprep.subr.mxu0 0.0
    %577 = vmatpush1.msra.mxu0 0.0
    %578 = vmatprep.subr.mxu0 0.0
    %579 = vmatpush1.msra.mxu0 0.0
    %580 = vmatprep.subr.mxu0 0.0
    %581 = vmatpush1.msra.mxu0 0.0
    %582 = vmatprep.subr.mxu0 0.0
    %583 = vmatpush1.msra.mxu0 0.0
    %584 = vmatprep.subr.mxu0 0.0
    %585 = vmatpush1.msra.mxu0 0.0
    %586 = vmatprep.subr.mxu0 0.0
    %587 = vmatpush1.msra.mxu0 0.0
    %588 = vmatprep.subr.mxu0 0.0
    %589 = vmatpush1.msra.mxu0 0.0
    %590 = vmatprep.subr.mxu0 0.0
    %591 = vmatpush1.msra.mxu0 0.0
    %592 = vmatprep.subr.mxu0 0.0
    %593 = vmatpush1.msra.mxu0 0.0
    %594 = vmatprep.subr.mxu0 0.0
    %595 = vmatpush1.msra.mxu0 0.0
    %596 = vmatprep.subr.mxu0 0.0
    %597 = vmatpush1.msra.mxu0 0.0
    %598 = vmatprep.subr.mxu0 0.0
    %599 = vmatpush1.msra.mxu0 0.0
    %600 = vmatprep.subr.mxu0 0.0
    %601 = vmatpush1.msra.mxu0 0.0
    %602 = vmatprep.subr.mxu0 0.0
    %603 = vmatpush1.msra.mxu0 0.0
    %604 = vmatprep.subr.mxu0 0.0
    %605 = vmatpush1.msra.mxu0 0.0
    %606 = vmatprep.subr.mxu0 0.0
    %607 = vmatpush1.msra.mxu0 0.0
    %608 = vmatprep.subr.mxu0 0.0
    %609 = vmatpush1.msra.mxu0 0.0
    %610 = vmatprep.subr.mxu0 0.0
    %611 = vmatpush1.msra.mxu0 0.0
    %612 = vmatprep.subr.mxu0 0.0
    %613 = vmatpush1.msra.mxu0 0.0
    %614 = vmatprep.subr.mxu0 0.0
    %615 = vmatpush1.msra.mxu0 0.0
    %616 = vmatprep.subr.mxu0 0.0
    %617 = vmatpush1.msra.mxu0 0.0
    %618 = vmatprep.subr.mxu0 0.0
    %619 = vmatpush1.msra.mxu0 0.0
    %620 = vmatprep.subr.mxu0 0.0
    %621 = vmatpush1.msra.mxu0 0.0
    %622 = vmatprep.subr.mxu0 0.0
    %623 = vmatpush1.msra.mxu0 0.0
    %624 = vmatprep.subr.mxu0 0.0
    %625 = vmatpush1.msra.mxu0 0.0
    %626 = vmatprep.subr.mxu0 0.0
    %627 = vmatpush1.msra.mxu0 0.0
    %628 = vmatprep.subr.mxu0 0.0
    %629 = vmatpush1.msra.mxu0 0.0
    %630 = vmatprep.mubr.f32.mxu0 0.0
    %631 = vmatmul.mubr.f32.gmra.mrb[0].mxu0 %v564
    %v632 = vpop.f32.mrb[0].mxu0
    %v633 = vadd.f32 0.0, %v632
    %v634 = vpop.f32.mrb[0].mxu0
    %635 = vdwg.mxu0
    %v636 = vadd.f32 %v562, %v633
    %v637 = vtanh.pop %v636
    %638 = vst.msk [vmem:[%s561] sm:$0x3] %vm161, %v637
    %s639 = scalar_lea.vmem [#allocation2], 12
    %v640 = vld [vmem:[%s639] sm:$0x3]
    %v642 = vsel %vm172, %v637, 0
    %644 = vmatprep.subr.mxu0 0.0
    %645 = vmatpush1.msra.mxu0 %v40
    %646 = vmatprep.subr.mxu0 0.0
    %647 = vmatpush1.msra.mxu0 %v41
    %648 = vmatprep.subr.mxu0 0.0
    %649 = vmatpush1.msra.mxu0 0.0
    %650 = vmatprep.subr.mxu0 0.0
    %651 = vmatpush1.msra.mxu0 0.0
    %652 = vmatprep.subr.mxu0 0.0
    %653 = vmatpush1.msra.mxu0 0.0
    %654 = vmatprep.subr.mxu0 0.0
    %655 = vmatpush1.msra.mxu0 0.0
    %656 = vmatprep.subr.mxu0 0.0
    %657 = vmatpush1.msra.mxu0 0.0
    %658 = vmatprep.subr.mxu0 0.0
    %659 = vmatpush1.msra.mxu0 0.0
    %660 = vmatprep.subr.mxu0 0.0
    %661 = vmatpush1.msra.mxu0 0.0
    %662 = vmatprep.subr.mxu0 0.0
    %663 = vmatpush1.msra.mxu0 0.0
    %664 = vmatprep.subr.mxu0 0.0
    %665 = vmatpush1.msra.mxu0 0.0
    %666 = vmatprep.subr.mxu0 0.0
    %667 = vmatpush1.msra.mxu0 0.0
    %668 = vmatprep.subr.mxu0 0.0
    %669 = vmatpush1.msra.mxu0 0.0
    %670 = vmatprep.subr.mxu0 0.0
    %671 = vmatpush1.msra.mxu0 0.0
    %672 = vmatprep.subr.mxu0 0.0
    %673 = vmatpush1.msra.mxu0 0.0
    %674 = vmatprep.subr.mxu0 0.0
    %675 = vmatpush1.msra.mxu0 0.0
    %676 = vmatprep.subr.mxu0 0.0
    %677 = vmatpush1.msra.mxu0 0.0
    %678 = vmatprep.subr.mxu0 0.0
    %679 = vmatpush1.msra.mxu0 0.0
    %680 = vmatprep.subr.mxu0 0.0
    %681 = vmatpush1.msra.mxu0 0.0
    %682 = vmatprep.subr.mxu0 0.0
    %683 = vmatpush1.msra.mxu0 0.0
    %684 = vmatprep.subr.mxu0 0.0
    %685 = vmatpush1.msra.mxu0 0.0
    %686 = vmatprep.subr.mxu0 0.0
    %687 = vmatpush1.msra.mxu0 0.0
    %688 = vmatprep.subr.mxu0 0.0
    %689 = vmatpush1.msra.mxu0 0.0
    %690 = vmatprep.subr.mxu0 0.0
    %691 = vmatpush1.msra.mxu0 0.0
    %692 = vmatprep.subr.mxu0 0.0
    %693 = vmatpush1.msra.mxu0 0.0
    %694 = vmatprep.subr.mxu0 0.0
    %695 = vmatpush1.msra.mxu0 0.0
    %696 = vmatprep.subr.mxu0 0.0
    %697 = vmatpush1.msra.mxu0 0.0
    %698 = vmatprep.subr.mxu0 0.0
    %699 = vmatpush1.msra.mxu0 0.0
    %700 = vmatprep.subr.mxu0 0.0
    %701 = vmatpush1.msra.mxu0 0.0
    %702 = vmatprep.subr.mxu0 0.0
    %703 = vmatpush1.msra.mxu0 0.0
    %704 = vmatprep.subr.mxu0 0.0
    %705 = vmatpush1.msra.mxu0 0.0
    %706 = vmatprep.subr.mxu0 0.0
    %707 = vmatpush1.msra.mxu0 0.0
    %708 = vmatprep.mubr.f32.mxu0 0.0
    %709 = vmatmul.mubr.f32.gmra.mrb[0].mxu0 %v642
    %v710 = vpop.f32.mrb[0].mxu0
    %v711 = vadd.f32 0.0, %v710
    %v712 = vpop.f32.mrb[0].mxu0
    %713 = vdwg.mxu0
    %v714 = vadd.f32 %v640, %v711
    %v715 = vtanh.pop %v714
    %716 = vst.msk [vmem:[%s639] sm:$0x3] %vm161, %v715
    %s717 = scalar_lea.vmem [#allocation2], 14
    %v718 = vld [vmem:[%s717] sm:$0x3]
    %v720 = vsel %vm172, %v715, 0
    %722 = vmatprep.subr.mxu0 0.0
    %723 = vmatpush1.msra.mxu0 %v40
    %724 = vmatprep.subr.mxu0 0.0
    %725 = vmatpush1.msra.mxu0 %v41
    %726 = vmatprep.subr.mxu0 0.0
    %727 = vmatpush1.msra.mxu0 0.0
    %728 = vmatprep.subr.mxu0 0.0
    %729 = vmatpush1.msra.mxu0 0.0
    %730 = vmatprep.subr.mxu0 0.0
    %731 = vmatpush1.msra.mxu0 0.0
    %732 = vmatprep.subr.mxu0 0.0
    %733 = vmatpush1.msra.mxu0 0.0
    %734 = vmatprep.subr.mxu0 0.0
    %735 = vmatpush1.msra.mxu0 0.0
    %736 = vmatprep.subr.mxu0 0.0
    %737 = vmatpush1.msra.mxu0 0.0
    %738 = vmatprep.subr.mxu0 0.0
    %739 = vmatpush1.msra.mxu0 0.0
    %740 = vmatprep.subr.mxu0 0.0
    %741 = vmatpush1.msra.mxu0 0.0
    %742 = vmatprep.subr.mxu0 0.0
    %743 = vmatpush1.msra.mxu0 0.0
    %744 = vmatprep.subr.mxu0 0.0
    %745 = vmatpush1.msra.mxu0 0.0
    %746 = vmatprep.subr.mxu0 0.0
    %747 = vmatpush1.msra.mxu0 0.0
    %748 = vmatprep.subr.mxu0 0.0
    %749 = vmatpush1.msra.mxu0 0.0
    %750 = vmatprep.subr.mxu0 0.0
    %751 = vmatpush1.msra.mxu0 0.0
    %752 = vmatprep.subr.mxu0 0.0
    %753 = vmatpush1.msra.mxu0 0.0
    %754 = vmatprep.subr.mxu0 0.0
    %755 = vmatpush1.msra.mxu0 0.0
    %756 = vmatprep.subr.mxu0 0.0
    %757 = vmatpush1.msra.mxu0 0.0
    %758 = vmatprep.subr.mxu0 0.0
    %759 = vmatpush1.msra.mxu0 0.0
    %760 = vmatprep.subr.mxu0 0.0
    %761 = vmatpush1.msra.mxu0 0.0
    %762 = vmatprep.subr.mxu0 0.0
    %763 = vmatpush1.msra.mxu0 0.0
    %764 = vmatprep.subr.mxu0 0.0
    %765 = vmatpush1.msra.mxu0 0.0
    %766 = vmatprep.subr.mxu0 0.0
    %767 = vmatpush1.msra.mxu0 0.0
    %768 = vmatprep.subr.mxu0 0.0
    %769 = vmatpush1.msra.mxu0 0.0
    %770 = vmatprep.subr.mxu0 0.0
    %771 = vmatpush1.msra.mxu0 0.0
    %772 = vmatprep.subr.mxu0 0.0
    %773 = vmatpush1.msra.mxu0 0.0
    %774 = vmatprep.subr.mxu0 0.0
    %775 = vmatpush1.msra.mxu0 0.0
    %776 = vmatprep.subr.mxu0 0.0
    %777 = vmatpush1.msra.mxu0 0.0
    %778 = vmatprep.subr.mxu0 0.0
    %779 = vmatpush1.msra.mxu0 0.0
    %780 = vmatprep.subr.mxu0 0.0
    %781 = vmatpush1.msra.mxu0 0.0
    %782 = vmatprep.subr.mxu0 0.0
    %783 = vmatpush1.msra.mxu0 0.0
    %784 = vmatprep.subr.mxu0 0.0
    %785 = vmatpush1.msra.mxu0 0.0
    %786 = vmatprep.mubr.f32.mxu0 0.0
    %787 = vmatmul.mubr.f32.gmra.mrb[0].mxu0 %v720
    %v788 = vpop.f32.mrb[0].mxu0
    %v789 = vadd.f32 0.0, %v788
    %v790 = vpop.f32.mrb[0].mxu0
    %791 = vdwg.mxu0
    %v792 = vadd.f32 %v718, %v789
    %v793 = vtanh.pop %v792
    %794 = vst.msk [vmem:[%s717] sm:$0x3] %vm161, %v793
    %795 = vst.msk [vmem:[#allocation4] sm:$0x3] %vm161, %v793
    %v796 = vld [vmem:[#allocation2] sm:$0x3]
    %v797 = vld [vmem:[#allocation2 + $0x2] sm:$0x3]
    %v798 = vld [vmem:[#allocation2 + $0x4] sm:$0x3]
    %v799 = vld [vmem:[#allocation2 + $0x6] sm:$0x3]
    %v800 = vld [vmem:[#allocation2 + $0x8] sm:$0x3]
    %v801 = vld [vmem:[#allocation2 + $0xa] sm:$0x3]
    %v802 = vld [vmem:[#allocation2 + $0xc] sm:$0x3]
    %v803 = vld [vmem:[#allocation2 + $0xe] sm:$0x3]
    %v804 = vmax.f32 %v796, 0.0
    %v805 = vmax.f32 %v797, 0.0
    %v806 = vmax.f32 %v798, 0.0
    %v807 = vmax.f32 %v799, 0.0
    %v808 = vmax.f32 %v800, 0.0
    %v809 = vmax.f32 %v801, 0.0
    %v810 = vmax.f32 %v802, 0.0
    %v811 = vmax.f32 %v803, 0.0
    %v812 = vld [vmem:[%s5] sm:$0x1]
    %v814 = vlaneseq
    %v815 = vshrl.u32 %v814, 7
    %v816 = vsub.s32 0, %v815
    %v817 = vrot.slane %v812, %v816
    %v819 = vmul.f32 %v804, %v817
    %v820 = vmul.f32 %v805, %v817
    %v821 = vmul.f32 %v806, %v817
    %v822 = vmul.f32 %v807, %v817
    %v823 = vmul.f32 %v808, %v817
    %v824 = vmul.f32 %v809, %v817
    %v825 = vmul.f32 %v810, %v817
    %v826 = vmul.f32 %v811, %v817
    %v827 = vsel %vm161, %v819, 0.0
    %828 = vadd.xlane.f32.xlu0 %v827
    %v829 = vpop.xlane.xlu0 %828
    %v830 = vsel %vm161, %v820, 0.0
    %831 = vadd.xlane.f32.xlu0 %v830
    %v832 = vpop.xlane.xlu0 %831
    %v833 = vsel %vm161, %v821, 0.0
    %834 = vadd.xlane.f32.xlu0 %v833
    %v835 = vpop.xlane.xlu0 %834
    %v836 = vsel %vm161, %v822, 0.0
    %837 = vadd.xlane.f32.xlu0 %v836
    %v838 = vpop.xlane.xlu0 %837
    %v839 = vsel %vm161, %v823, 0.0
    %840 = vadd.xlane.f32.xlu0 %v839
    %v841 = vpop.xlane.xlu0 %840
    %v842 = vsel %vm161, %v824, 0.0
    %843 = vadd.xlane.f32.xlu0 %v842
    %v844 = vpop.xlane.xlu0 %843
    %v845 = vsel %vm161, %v825, 0.0
    %846 = vadd.xlane.f32.xlu0 %v845
    %v847 = vpop.xlane.xlu0 %846
    %v848 = vsel %vm161, %v826, 0.0
    %849 = vadd.xlane.f32.xlu0 %v848
    %v850 = vpop.xlane.xlu0 %849
    %v851 = vld [vmem:[#allocation3] sm:$0x1]
    %v853 = vlaneseq
    %v854 = vshrl.u32 %v853, 7
    %v855 = vsub.s32 0, %v854
    %v856 = vrot.slane %v851, %v855
    %857 = vset.pattern.permute.xlu0 0
    %858 = vperm.xlu0 %857, %v856
    %v859 = vpop.permute.xlu0 %858
    %v861 = vadd.f32 %v829, %v859
    %v862 = vadd.f32 %v832, %v859
    %v863 = vadd.f32 %v835, %v859
    %v864 = vadd.f32 %v838, %v859
    %v865 = vadd.f32 %v841, %v859
    %v866 = vadd.f32 %v844, %v859
    %v867 = vadd.f32 %v847, %v859
    %v868 = vadd.f32 %v850, %v859
    %v869 = vxor.u32 %v861, 2147483648
    %v870 = vxor.u32 %v862, 2147483648
    %v871 = vxor.u32 %v863, 2147483648
    %v872 = vxor.u32 %v864, 2147483648
    %v873 = vxor.u32 %v865, 2147483648
    %v874 = vxor.u32 %v866, 2147483648
    %v875 = vxor.u32 %v867, 2147483648
    %v876 = vxor.u32 %v868, 2147483648
    %v877 = vmul.f32 %v869, 1.442695
    %v878 = vpow.pop %v877
    %v879 = vmul.f32 %v870, 1.442695
    %v880 = vpow.pop %v879
    %v881 = vmul.f32 %v871, 1.442695
    %v882 = vpow.pop %v881
    %v883 = vmul.f32 %v872, 1.442695
    %v884 = vpow.pop %v883
    %v885 = vmul.f32 %v873, 1.442695
    %v886 = vpow.pop %v885
    %v887 = vmul.f32 %v874, 1.442695
    %v888 = vpow.pop %v887
    %v889 = vmul.f32 %v875, 1.442695
    %v890 = vpow.pop %v889
    %v891 = vmul.f32 %v876, 1.442695
    %v892 = vpow.pop %v891
    %v893 = vadd.f32 %v878, 1.0
    %v894 = vadd.f32 %v880, 1.0
    %v895 = vadd.f32 %v882, 1.0
    %v896 = vadd.f32 %v884, 1.0
    %v897 = vadd.f32 %v886, 1.0
    %v898 = vadd.f32 %v888, 1.0
    %v899 = vadd.f32 %v890, 1.0
    %v900 = vadd.f32 %v892, 1.0
    %v901 = vrcp.pop %v893
    %v902 = vmul.f32 1.0, %v901
    %v903 = vrcp.pop %v894
    %v904 = vmul.f32 1.0, %v903
    %v905 = vrcp.pop %v895
    %v906 = vmul.f32 1.0, %v905
    %v907 = vrcp.pop %v896
    %v908 = vmul.f32 1.0, %v907
    %v909 = vrcp.pop %v897
    %v910 = vmul.f32 1.0, %v909
    %v911 = vrcp.pop %v898
    %v912 = vmul.f32 1.0, %v911
    %v913 = vrcp.pop %v899
    %v914 = vmul.f32 1.0, %v913
    %v915 = vrcp.pop %v900
    %v916 = vmul.f32 1.0, %v915
    %v925 = vlaneseq
    %v926 = vand.u32 %v925, 127
    %v927 = vlaneseq
    %v928 = vshrl.u32 %v927, 7
    %v929 = vsub.s32 %v926, %v928
    %v930 = vrot.slane %v902, %v929
    %v931 = vlaneseq
    %v932 = vshrl.u32 %v931, 7
    %v933 = vsub.s32 %v926, %v932
    %v934 = vrot.slane %v904, %v933
    %v935 = vlaneseq
    %v936 = vshrl.u32 %v935, 7
    %v937 = vsub.s32 %v926, %v936
    %v938 = vrot.slane %v906, %v937
    %v939 = vlaneseq
    %v940 = vshrl.u32 %v939, 7
    %v941 = vsub.s32 %v926, %v940
    %v942 = vrot.slane %v908, %v941
    %v943 = vlaneseq
    %v944 = vshrl.u32 %v943, 7
    %v945 = vsub.s32 %v926, %v944
    %v946 = vrot.slane %v910, %v945
    %v947 = vlaneseq
    %v948 = vshrl.u32 %v947, 7
    %v949 = vsub.s32 %v926, %v948
    %v950 = vrot.slane %v912, %v949
    %v951 = vlaneseq
    %v952 = vshrl.u32 %v951, 7
    %v953 = vsub.s32 %v926, %v952
    %v954 = vrot.slane %v914, %v953
    %v955 = vlaneseq
    %v956 = vshrl.u32 %v955, 7
    %v957 = vsub.s32 %v926, %v956
    %v958 = vrot.slane %v916, %v957
    %vm959 = vcmask 1041409
    %v960 = vsel %vm959, %v934, %v930
    %vm961 = vcmask 1042434
    %v962 = vsel %vm961, %v938, %v960
    %vm963 = vcmask 1043459
    %v964 = vsel %vm963, %v942, %v962
    %vm965 = vcmask 1044484
    %v966 = vsel %vm965, %v946, %v964
    %vm967 = vcmask 1045509
    %v968 = vsel %vm967, %v950, %v966
    %vm969 = vcmask 1046534
    %v970 = vsel %vm969, %v954, %v968
    %vm971 = vcmask 1047559
    %v972 = vsel %vm971, %v958, %v970
    %vm974 = vcmask 15360
    %975 = vst.msk [vmem:[%s7] sm:$0xff] %vm974, %v972
    // Predicated region
    $region30: #{rnn_net_forward.1} parent=1 // pred_check
      _
    $region31: #{rnn_net_forward.1} parent=1 // pred_check_branch
      %977 = sbr.rel (0) target = $region33
    $region32: #{rnn_net_forward.1} parent=1 // pred_region
      _
    $region33: #{rnn_net_forward.1} parent=1 // pred_fallthru
      _
    // Predicated region
    $region34: #{rnn_net_forward.1} parent=1 // pred_check
      _
    $region35: #{rnn_net_forward.1} parent=1 // pred_check_branch
      %979 = sbr.rel (0) target = $region37
    $region36: #{rnn_net_forward.1} parent=1 // pred_region
      %s981 = ssub.s32 32, 32
      %982 = vsyncadd [#allocation5], %s981
      %s984 = sshll.u32 [#allocation4], 4
      %s985 = int_to_ptr.vmem [resolvable:$true] %s984
      %987 = dma.vmem_to_hbm [thread:$0]  %s985, 32, %s8, [#allocation5]
    $region37: #{rnn_net_forward.1} parent=1 // pred_fallthru
      _
    // Predicated region
    $region38: #{rnn_net_forward.1} parent=1 // pred_check
      _
    $region39: #{rnn_net_forward.1} parent=1 // pred_check_branch
      %989 = sbr.rel (0) target = $region41
    $region40: #{rnn_net_forward.1} parent=1 // pred_region
      _
    $region41: #{rnn_net_forward.1} parent=1 // pred_fallthru
      _
    // Predicated region
    $region42: #{rnn_net_forward.1} parent=1 // pred_check
      _
    $region43: #{rnn_net_forward.1} parent=1 // pred_check_branch
      %991 = sbr.rel (0) target = $region45
    $region44: #{rnn_net_forward.1} parent=1 // pred_region
      %992 = dma.done [#allocation5], 32
    $region45: #{rnn_net_forward.1} parent=1 // pred_fallthru
      _
    %993 = vsyncpa [#allocation5], 1

</llo_original>
